<compile_context>
chip_gen: v7x
topology: tpu7x:2x2x1
jax: 0.10.0
libtpu: 0.0.40
codegen_flags: <defaults>
</compile_context>

<pallas_src>
import functools

import jax
import jax.numpy as jnp
from jax.experimental import pallas as pl
from jax.experimental.pallas import tpu as pltpu

LANE = 128      # vreg lane width       -> last dim multiple
SUBLANE = 8     # vreg sublane width    -> second-to-last dim multiple


def _round_up(n, m):
    return ((n + m - 1) // m) * m


def _pad_dim(d):
    # 256-align large dims to fill v6e/v7x's 2x256x256 MXU; 128 otherwise
    # (padding waste would dominate for small dims, and v5e's MXU is 128-wide).
    align = 256 if d >= 512 else LANE
    return _round_up(d, align)


def _vmem_capacity_bytes():
    """Physical VMEM capacity of the current chip (generation-aware)."""
    try:
        return int(pltpu.get_tpu_info().vmem_capacity_bytes)
    except Exception:
        return 64 << 20   # conservative default (v7x per-TC size)


def _batch_tile(batch, tile_batch):
    """Pick a sublane-aligned batch tile; >=2 grid steps when possible so the
    'parallel' axis can shard over v7x's two TensorCores."""
    tile_batch = max(SUBLANE, (tile_batch // SUBLANE) * SUBLANE)
    pbatch_min = _round_up(batch, SUBLANE)
    if pbatch_min > SUBLANE:
        half = _round_up((pbatch_min + 1) // 2, SUBLANE)
        tb = min(tile_batch, half)
    else:
        tb = pbatch_min
    pbatch = _round_up(batch, tb)
    return tb, pbatch


# ----------------------------------------------------------------------------
# Fused kernel: a chunk of the Linear+ReLU stack in one body.
# refs = (x_ref, w0, b0, w1, b1, ..., w_{L-1}, b_{L-1}, o_ref)
# ----------------------------------------------------------------------------
def _encoder_fused_kernel(n_layers, *refs):
    x_ref, o_ref = refs[0], refs[-1]
    wb = refs[1:-1]

    h = x_ref[...]                                   # (TB, K0)
    for i in range(n_layers):                        # static unroll over layers
        w = wb[2 * i][...]                           # (K_i, N_i), compute dtype
        b = wb[2 * i + 1][...]                       # (1, N_i), f32
        acc = jnp.dot(h.astype(w.dtype), w,          # MXU, f32 accumulate
                      preferred_element_type=jnp.float32)
        h = jnp.maximum(acc + b, 0.0)                # bias + ReLU in f32 acc
        if i + 1 < n_layers:
            h = h.astype(w.dtype)                    # keep intermediates in
                                                     # compute dtype (no-op cast
                                                     # at next layer's dot)
    o_ref[...] = h.astype(o_ref.dtype)


# ----------------------------------------------------------------------------
# Parameter prep (once, outside the hot path):
#   * weights stored (in, out) [transpose of PyTorch's (out, in)]
#   * hidden dims zero-padded lane-dense; layer 0's K and last layer's N stay
#     UNPADDED so x / output need no wrapper-side feature padding or slicing.
#   * weights cast to compute_dtype: bf16 is the MXU-native fast path on
#     v5e/v6e/v7x.  f32 is multi-pass emulated (~3x slower) — use it only for
#     strict-parity tests.  Biases stay f32, shaped (1, out).
# Zero padding is exact: padded columns stay 0 through bias/ReLU and multiply
# zero-padded weight rows, so they never contaminate real outputs.
# ----------------------------------------------------------------------------
def prepare_encoder_params(weights, biases, compute_dtype=jnp.bfloat16):
    n = len(weights)
    wp, bp = [], []
    for i, (w, b) in enumerate(zip(weights, biases)):
        in_dim, out_dim = w.shape
        pin = in_dim if i == 0 else _pad_dim(in_dim)
        pout = out_dim if i == n - 1 else _pad_dim(out_dim)
        w_pad = jnp.zeros((pin, pout), compute_dtype)
        w_pad = w_pad.at[:in_dim, :out_dim].set(w.astype(compute_dtype))
        b_pad = jnp.zeros((1, pout), jnp.float32)
        b_pad = b_pad.at[0, :out_dim].set(b.astype(jnp.float32))
        wp.append(w_pad)
        bp.append(b_pad)
    return wp, bp


# ----------------------------------------------------------------------------
# One fused pallas_call over a chunk of consecutive layers.
# ----------------------------------------------------------------------------
def _run_chunk(x, weights, biases, *, tile_batch, single_buffer_params,
               vmem_cap):
    n_layers = len(weights)
    batch, in_dim = x.shape
    out_dim = weights[-1].shape[1]

    tb, pbatch = _batch_tile(batch, tile_batch)
    if pbatch != batch:
        x = jnp.pad(x, ((0, pbatch - batch), (0, 0)))   # batch-dim pad only

    # Params are grid-invariant (index_map -> (0,0)); single-buffer them so the
    # resident footprint is 1x (matters for big hidden on v7x's 64 MiB VMEM).
    param_kwargs = (dict(pipeline_mode=pl.Buffered(1))
                    if single_buffer_params else {})

    in_specs = [pl.BlockSpec((tb, in_dim), lambda i: (i, 0))]
    operands = [x]
    for w, b in zip(weights, biases):
        kdim, ndim = w.shape
        in_specs.append(pl.BlockSpec((kdim, ndim), lambda i: (0, 0),
                                     **param_kwargs))
        in_specs.append(pl.BlockSpec((1, ndim), lambda i: (0, 0),
                                     **param_kwargs))
        operands += [w, b]
    out_spec = pl.BlockSpec((tb, out_dim), lambda i: (i, 0))

    # Advisory cost estimate for XLA's scheduler.
    flops = 2 * pbatch * sum(w.shape[0] * w.shape[1] for w in weights)
    param_bytes = sum(int(w.size) * w.dtype.itemsize for w in weights)
    param_bytes += sum(int(b.size) * b.dtype.itemsize for b in biases)
    bytes_accessed = (int(x.size) * x.dtype.itemsize + param_bytes
                      + pbatch * out_dim * x.dtype.itemsize)

    # Generation-aware VMEM budget: capacity minus headroom
    # (~48 MiB on v7x, ~112 MiB on v5e/v6e).
    vmem_limit = max(vmem_cap - (16 << 20), 32 << 20)

    return pl.pallas_call(
        functools.partial(_encoder_fused_kernel, n_layers),
        out_shape=jax.ShapeDtypeStruct((pbatch, out_dim), x.dtype),
        grid=(pbatch // tb,),
        in_specs=in_specs,
        out_specs=out_spec,
        compiler_params=pltpu.CompilerParams(
            dimension_semantics=("parallel",),
            vmem_limit_bytes=vmem_limit),
        cost_estimate=pl.CostEstimate(flops=flops, transcendentals=0,
                                      bytes_accessed=bytes_accessed),
    )(*operands)


# ----------------------------------------------------------------------------
# Full Encoder forward.  The whole stack normally runs as ONE pallas_call with
# all params VMEM-resident; if params would overflow VMEM the stack is split
# across a few fused calls.
# ----------------------------------------------------------------------------
@functools.partial(jax.jit,
                   static_argnames=("tile_batch", "single_buffer_params"))
def encoder_forward(x, padded_weights, padded_biases, *, tile_batch=512,
                    single_buffer_params=True):
    batch = x.shape[0]
    vmem_cap = _vmem_capacity_bytes()
    # Leave room for activation tiles / compiler scratch next to the params.
    param_budget = max(vmem_cap - (24 << 20), vmem_cap // 2)

    # Greedy split of the layer stack into VMEM-resident chunks.
    chunks, cur, cur_bytes = [], [], 0
    for w, b in zip(padded_weights, padded_biases):
        nbytes = (int(w.size) * w.dtype.itemsize
                  + int(b.size) * b.dtype.itemsize)
        if cur and cur_bytes + nbytes > param_budget:
            chunks.append(cur)
            cur, cur_bytes = [], 0
        cur.append((w, b))
        cur_bytes += nbytes
        # TODO(synk): a single layer larger than param_budget would need a
        # K/N-tiled accumulator path (extra "arbitrary" grid axis + pl.when
        # init/finalize); not implemented — never hit at these sizes.
    chunks.append(cur)

    h = x
    for chunk in chunks:
        ws = [w for w, _ in chunk]
        bs = [b for _, b in chunk]
        h = _run_chunk(h, ws, bs, tile_batch=tile_batch,
                       single_buffer_params=single_buffer_params,
                       vmem_cap=vmem_cap)
    return h[:batch] if h.shape[0] != batch else h


def _forward_with_fallback(x, wp, bp, **kw):
    """Prefer single-buffered resident params; fall back to default
    double-buffered BlockSpecs if pl.Buffered(1) is rejected by this jax."""
    try:
        return encoder_forward(x, wp, bp, **kw)
    except Exception:
        return encoder_forward(x, wp, bp, single_buffer_params=False, **kw)


# ----------------------------------------------------------------------------
# Deterministic init mirroring nn.Linear's default
# (uniform in [-1/sqrt(in_features), 1/sqrt(in_features)]).
# ----------------------------------------------------------------------------
def init_encoder_params(key, num_encoder_layers, emb_size, hidden_size,
                        dtype=jnp.float32):
    weights, biases = [], []
    for i in range(num_encoder_layers):
        in_dim = emb_size if i == 0 else hidden_size
        out_dim = emb_size if i == num_encoder_layers - 1 else hidden_size
        key, kw, kb = jax.random.split(key, 3)
        bound = 1.0 / jnp.sqrt(jnp.array(in_dim, dtype))
        weights.append(jax.random.uniform(kw, (in_dim, out_dim), dtype,
                                          minval=-bound, maxval=bound))
        biases.append(jax.random.uniform(kb, (out_dim,), dtype,
                                         minval=-bound, maxval=bound))
    return weights, biases


def _reference_forward(x, weights, biases):
    """Pure-JAX f32 reference for correctness check."""
    h = x
    for w, b in zip(weights, biases):
        h = jnp.maximum(h @ w + b, 0.0)
    return h


if __name__ == "__main__":
    # Small config consistent with the module's __init__.
    NUM_ENCODER_LAYERS = 3
    EMB_SIZE = 32
    HIDDEN_SIZE = 64
    BATCH = 8

    key = jax.random.PRNGKey(0)
    key, kx = jax.random.split(key)
    x = jax.random.normal(kx, (BATCH, EMB_SIZE), jnp.float32)
    weights, biases = init_encoder_params(key, NUM_ENCODER_LAYERS,
                                          EMB_SIZE, HIDDEN_SIZE)

    ref = _reference_forward(x, weights, biases)

    # ---- f32 MXU path: strict numeric parity (tests only; slow on MXU) -----
    wp32, bp32 = prepare_encoder_params(weights, biases,
                                        compute_dtype=jnp.float32)
    out_f32 = _forward_with_fallback(x, wp32, bp32)
    out_f32 = jax.block_until_ready(out_f32)
    assert out_f32.shape == (BATCH, EMB_SIZE), out_f32.shape
    assert jnp.allclose(out_f32, ref, atol=1e-4, rtol=1e-4), \
        "f32 fused kernel mismatch vs reference"

    # ---- bf16 MXU path: the production-fast configuration ------------------
    wp16, bp16 = prepare_encoder_params(weights, biases,
                                        compute_dtype=jnp.bfloat16)
    out_bf16 = _forward_with_fallback(x, wp16, bp16)
    out_bf16 = jax.block_until_ready(out_bf16)
    assert out_bf16.shape == (BATCH, EMB_SIZE), out_bf16.shape
    assert jnp.allclose(out_bf16, ref, atol=5e-2, rtol=5e-2), \
        "bf16 fused kernel mismatch vs reference"

    print("KERNEL_OK")
</pallas_src>

<mosaic_0001>
module attributes {stable_mosaic.version = 11 : i64} {
  func.func @_encoder_fused_kernel(%arg0: i32, %arg1: memref<8x32xf32, #tpu.memory_space<vmem>>, %arg2: memref<32x128xf32, #tpu.memory_space<vmem>>, %arg3: memref<1x128xf32, #tpu.memory_space<vmem>>, %arg4: memref<128x128xf32, #tpu.memory_space<vmem>>, %arg5: memref<1x128xf32, #tpu.memory_space<vmem>>, %arg6: memref<128x32xf32, #tpu.memory_space<vmem>>, %arg7: memref<1x32xf32, #tpu.memory_space<vmem>>, %arg8: memref<8x32xf32, #tpu.memory_space<vmem>>) attributes {dimension_semantics = [#tpu.dimension_semantics<parallel>], iteration_bounds = array<i64: 1>, scalar_prefetch = 0 : i64, scratch_operands = 0 : i64, tpu.core_type = #tpu.core_type<tc>, window_params = [{transform_indices = @transform_0, window_bounds = array<i64: 8, 32>}, {pipeline_mode = #tpu.pipeline_mode<synchronous>, transform_indices = @transform_1, window_bounds = array<i64: 32, 128>}, {pipeline_mode = #tpu.pipeline_mode<synchronous>, transform_indices = @transform_2, window_bounds = array<i64: 1, 128>}, {pipeline_mode = #tpu.pipeline_mode<synchronous>, transform_indices = @transform_3, window_bounds = array<i64: 128, 128>}, {pipeline_mode = #tpu.pipeline_mode<synchronous>, transform_indices = @transform_4, window_bounds = array<i64: 1, 128>}, {pipeline_mode = #tpu.pipeline_mode<synchronous>, transform_indices = @transform_5, window_bounds = array<i64: 128, 32>}, {pipeline_mode = #tpu.pipeline_mode<synchronous>, transform_indices = @transform_6, window_bounds = array<i64: 1, 32>}, {transform_indices = @transform_7, window_bounds = array<i64: 8, 32>}]} {
    %c0 = arith.constant 0 : index
    %c0_0 = arith.constant 0 : index
    %0 = vector.load %arg1[%c0, %c0_0] : memref<8x32xf32, #tpu.memory_space<vmem>>, vector<8x32xf32>
    %c0_1 = arith.constant 0 : index
    %c0_2 = arith.constant 0 : index
    %1 = vector.load %arg2[%c0_1, %c0_2] : memref<32x128xf32, #tpu.memory_space<vmem>>, vector<32x128xf32>
    %c0_3 = arith.constant 0 : index
    %c0_4 = arith.constant 0 : index
    %2 = vector.load %arg3[%c0_3, %c0_4] : memref<1x128xf32, #tpu.memory_space<vmem>>, vector<1x128xf32>
    %cst = arith.constant dense<0.000000e+00> : vector<8x128xf32>
    %3 = tpu.matmul %0, %1, %cst {dimension_numbers = #tpu.dot_dimension_numbers<[1], [0], [0], [1], [0, 0, 1, 1], [], []>} : vector<8x32xf32>, vector<32x128xf32>, vector<8x128xf32> -> vector<8x128xf32>
    %4 = vector.broadcast %2 : vector<1x128xf32> to vector<8x128xf32>
    %5 = arith.addf %3, %4 : vector<8x128xf32>
    %cst_5 = arith.constant 0.000000e+00 : f32
    %6 = vector.broadcast %cst_5 : f32 to vector<8x128xf32>
    %7 = arith.maximumf %5, %6 : vector<8x128xf32>
    %c0_6 = arith.constant 0 : index
    %c0_7 = arith.constant 0 : index
    %8 = vector.load %arg4[%c0_6, %c0_7] : memref<128x128xf32, #tpu.memory_space<vmem>>, vector<128x128xf32>
    %c0_8 = arith.constant 0 : index
    %c0_9 = arith.constant 0 : index
    %9 = vector.load %arg5[%c0_8, %c0_9] : memref<1x128xf32, #tpu.memory_space<vmem>>, vector<1x128xf32>
    %cst_10 = arith.constant dense<0.000000e+00> : vector<8x128xf32>
    %10 = tpu.matmul %7, %8, %cst_10 {dimension_numbers = #tpu.dot_dimension_numbers<[1], [0], [0], [1], [0, 0, 1, 1], [], []>} : vector<8x128xf32>, vector<128x128xf32>, vector<8x128xf32> -> vector<8x128xf32>
    %11 = vector.broadcast %9 : vector<1x128xf32> to vector<8x128xf32>
    %12 = arith.addf %10, %11 : vector<8x128xf32>
    %cst_11 = arith.constant 0.000000e+00 : f32
    %13 = vector.broadcast %cst_11 : f32 to vector<8x128xf32>
    %14 = arith.maximumf %12, %13 : vector<8x128xf32>
    %c0_12 = arith.constant 0 : index
    %c0_13 = arith.constant 0 : index
    %15 = vector.load %arg6[%c0_12, %c0_13] : memref<128x32xf32, #tpu.memory_space<vmem>>, vector<128x32xf32>
    %c0_14 = arith.constant 0 : index
    %c0_15 = arith.constant 0 : index
    %16 = vector.load %arg7[%c0_14, %c0_15] : memref<1x32xf32, #tpu.memory_space<vmem>>, vector<1x32xf32>
    %cst_16 = arith.constant dense<0.000000e+00> : vector<8x32xf32>
    %17 = tpu.matmul %14, %15, %cst_16 {dimension_numbers = #tpu.dot_dimension_numbers<[1], [0], [0], [1], [0, 0, 1, 1], [], []>} : vector<8x128xf32>, vector<128x32xf32>, vector<8x32xf32> -> vector<8x32xf32>
    %18 = vector.broadcast %16 : vector<1x32xf32> to vector<8x32xf32>
    %19 = arith.addf %17, %18 : vector<8x32xf32>
    %cst_17 = arith.constant 0.000000e+00 : f32
    %20 = vector.broadcast %cst_17 : f32 to vector<8x32xf32>
    %21 = arith.maximumf %19, %20 : vector<8x32xf32>
    %c0_18 = arith.constant 0 : index
    %c0_19 = arith.constant 0 : index
    %22 = vector.load %arg8[%c0_18, %c0_19] : memref<8x32xf32, #tpu.memory_space<vmem>>, vector<8x32xf32>
    tpu.vector_store %arg8[%c0_18, %c0_19], %21 {strides = array<i32>} : memref<8x32xf32, #tpu.memory_space<vmem>>, vector<8x32xf32>,
    return
  }
  func.func @transform_0(%arg0: i32) -> (i32, i32) {
    %c0_i32 = arith.constant 0 : i32
    %c0_i32_0 = arith.constant 0 : i32
    return %arg0, %c0_i32 : i32, i32
  }
  func.func @transform_1(%arg0: i32) -> (i32, i32) {
    %c0_i32 = arith.constant 0 : i32
    %c0_i32_0 = arith.constant 0 : i32
    %c0_i32_1 = arith.constant 0 : i32
    return %c0_i32, %c0_i32_0 : i32, i32
  }
  func.func @transform_2(%arg0: i32) -> (i32, i32) {
    %c0_i32 = arith.constant 0 : i32
    %c0_i32_0 = arith.constant 0 : i32
    %c0_i32_1 = arith.constant 0 : i32
    return %c0_i32, %c0_i32_0 : i32, i32
  }
  func.func @transform_3(%arg0: i32) -> (i32, i32) {
    %c0_i32 = arith.constant 0 : i32
    %c0_i32_0 = arith.constant 0 : i32
    %c0_i32_1 = arith.constant 0 : i32
    return %c0_i32, %c0_i32_0 : i32, i32
  }
  func.func @transform_4(%arg0: i32) -> (i32, i32) {
    %c0_i32 = arith.constant 0 : i32
    %c0_i32_0 = arith.constant 0 : i32
    %c0_i32_1 = arith.constant 0 : i32
    return %c0_i32, %c0_i32_0 : i32, i32
  }
  func.func @transform_5(%arg0: i32) -> (i32, i32) {
    %c0_i32 = arith.constant 0 : i32
    %c0_i32_0 = arith.constant 0 : i32
    %c0_i32_1 = arith.constant 0 : i32
    return %c0_i32, %c0_i32_0 : i32, i32
  }
  func.func @transform_6(%arg0: i32) -> (i32, i32) {
    %c0_i32 = arith.constant 0 : i32
    %c0_i32_0 = arith.constant 0 : i32
    %c0_i32_1 = arith.constant 0 : i32
    return %c0_i32, %c0_i32_0 : i32, i32
  }
  func.func @transform_7(%arg0: i32) -> (i32, i32) {
    %c0_i32 = arith.constant 0 : i32
    %c0_i32_0 = arith.constant 0 : i32
    return %arg0, %c0_i32 : i32, i32
  }
}

module attributes {stable_mosaic.version = 11 : i64} {
  func.func @_encoder_fused_kernel(%arg0: i32, %arg1: memref<8x32xf32, #tpu.memory_space<vmem>>, %arg2: memref<32x128xf32, #tpu.memory_space<vmem>>, %arg3: memref<1x128xf32, #tpu.memory_space<vmem>>, %arg4: memref<128x128xf32, #tpu.memory_space<vmem>>, %arg5: memref<1x128xf32, #tpu.memory_space<vmem>>, %arg6: memref<128x32xf32, #tpu.memory_space<vmem>>, %arg7: memref<1x32xf32, #tpu.memory_space<vmem>>, %arg8: memref<8x32xf32, #tpu.memory_space<vmem>>) attributes {dimension_semantics = [#tpu.dimension_semantics<parallel>], iteration_bounds = array<i64: 1>, scalar_prefetch = 0 : i64, scratch_operands = 0 : i64, tpu.core_type = #tpu.core_type<tc>, window_params = [{transform_indices = @transform_0, window_bounds = array<i64: 8, 32>}, {pipeline_mode = #tpu.pipeline_mode<synchronous>, transform_indices = @transform_1, window_bounds = array<i64: 32, 128>}, {pipeline_mode = #tpu.pipeline_mode<synchronous>, transform_indices = @transform_2, window_bounds = array<i64: 1, 128>}, {pipeline_mode = #tpu.pipeline_mode<synchronous>, transform_indices = @transform_3, window_bounds = array<i64: 128, 128>}, {pipeline_mode = #tpu.pipeline_mode<synchronous>, transform_indices = @transform_4, window_bounds = array<i64: 1, 128>}, {pipeline_mode = #tpu.pipeline_mode<synchronous>, transform_indices = @transform_5, window_bounds = array<i64: 128, 32>}, {pipeline_mode = #tpu.pipeline_mode<synchronous>, transform_indices = @transform_6, window_bounds = array<i64: 1, 32>}, {transform_indices = @transform_7, window_bounds = array<i64: 8, 32>}]} {
    %c0 = arith.constant 0 : index
    %c0_0 = arith.constant 0 : index
    %0 = vector.load %arg1[%c0, %c0_0] : memref<8x32xf32, #tpu.memory_space<vmem>>, vector<8x32xf32>
    %c0_1 = arith.constant 0 : index
    %c0_2 = arith.constant 0 : index
    %1 = vector.load %arg2[%c0_1, %c0_2] : memref<32x128xf32, #tpu.memory_space<vmem>>, vector<32x128xf32>
    %c0_3 = arith.constant 0 : index
    %c0_4 = arith.constant 0 : index
    %2 = vector.load %arg3[%c0_3, %c0_4] : memref<1x128xf32, #tpu.memory_space<vmem>>, vector<1x128xf32>
    %cst = arith.constant dense<0.000000e+00> : vector<8x128xf32>
    %3 = tpu.matmul %0, %1, %cst {dimension_numbers = #tpu.dot_dimension_numbers<[1], [0], [0], [1], [0, 0, 1, 1], [], []>} : vector<8x32xf32>, vector<32x128xf32>, vector<8x128xf32> -> vector<8x128xf32>
    %4 = vector.broadcast %2 : vector<1x128xf32> to vector<8x128xf32>
    %5 = arith.addf %3, %4 : vector<8x128xf32>
    %cst_5 = arith.constant 0.000000e+00 : f32
    %6 = vector.broadcast %cst_5 : f32 to vector<8x128xf32>
    %7 = arith.maximumf %5, %6 : vector<8x128xf32>
    %c0_6 = arith.constant 0 : index
    %c0_7 = arith.constant 0 : index
    %8 = vector.load %arg4[%c0_6, %c0_7] : memref<128x128xf32, #tpu.memory_space<vmem>>, vector<128x128xf32>
    %c0_8 = arith.constant 0 : index
    %c0_9 = arith.constant 0 : index
    %9 = vector.load %arg5[%c0_8, %c0_9] : memref<1x128xf32, #tpu.memory_space<vmem>>, vector<1x128xf32>
    %cst_10 = arith.constant dense<0.000000e+00> : vector<8x128xf32>
    %10 = tpu.matmul %7, %8, %cst_10 {dimension_numbers = #tpu.dot_dimension_numbers<[1], [0], [0], [1], [0, 0, 1, 1], [], []>} : vector<8x128xf32>, vector<128x128xf32>, vector<8x128xf32> -> vector<8x128xf32>
    %11 = vector.broadcast %9 : vector<1x128xf32> to vector<8x128xf32>
    %12 = arith.addf %10, %11 : vector<8x128xf32>
    %cst_11 = arith.constant 0.000000e+00 : f32
    %13 = vector.broadcast %cst_11 : f32 to vector<8x128xf32>
    %14 = arith.maximumf %12, %13 : vector<8x128xf32>
    %c0_12 = arith.constant 0 : index
    %c0_13 = arith.constant 0 : index
    %15 = vector.load %arg6[%c0_12, %c0_13] : memref<128x32xf32, #tpu.memory_space<vmem>>, vector<128x32xf32>
    %c0_14 = arith.constant 0 : index
    %c0_15 = arith.constant 0 : index
    %16 = vector.load %arg7[%c0_14, %c0_15] : memref<1x32xf32, #tpu.memory_space<vmem>>, vector<1x32xf32>
    %cst_16 = arith.constant dense<0.000000e+00> : vector<8x32xf32>
    %17 = tpu.matmul %14, %15, %cst_16 {dimension_numbers = #tpu.dot_dimension_numbers<[1], [0], [0], [1], [0, 0, 1, 1], [], []>} : vector<8x128xf32>, vector<128x32xf32>, vector<8x32xf32> -> vector<8x32xf32>
    %18 = vector.broadcast %16 : vector<1x32xf32> to vector<8x32xf32>
    %19 = arith.addf %17, %18 : vector<8x32xf32>
    %cst_17 = arith.constant 0.000000e+00 : f32
    %20 = vector.broadcast %cst_17 : f32 to vector<8x32xf32>
    %21 = arith.maximumf %19, %20 : vector<8x32xf32>
    %c0_18 = arith.constant 0 : index
    %c0_19 = arith.constant 0 : index
    %22 = vector.load %arg8[%c0_18, %c0_19] : memref<8x32xf32, #tpu.memory_space<vmem>>, vector<8x32xf32>
    tpu.vector_store %arg8[%c0_18, %c0_19], %21 {strides = array<i32>} : memref<8x32xf32, #tpu.memory_space<vmem>>, vector<8x32xf32>,
    return
  }
  func.func @transform_0(%arg0: i32) -> (i32, i32) {
    %c0_i32 = arith.constant 0 : i32
    %c0_i32_0 = arith.constant 0 : i32
    return %arg0, %c0_i32 : i32, i32
  }
  func.func @transform_1(%arg0: i32) -> (i32, i32) {
    %c0_i32 = arith.constant 0 : i32
    %c0_i32_0 = arith.constant 0 : i32
    %c0_i32_1 = arith.constant 0 : i32
    return %c0_i32, %c0_i32_0 : i32, i32
  }
  func.func @transform_2(%arg0: i32) -> (i32, i32) {
    %c0_i32 = arith.constant 0 : i32
    %c0_i32_0 = arith.constant 0 : i32
    %c0_i32_1 = arith.constant 0 : i32
    return %c0_i32, %c0_i32_0 : i32, i32
  }
  func.func @transform_3(%arg0: i32) -> (i32, i32) {
    %c0_i32 = arith.constant 0 : i32
    %c0_i32_0 = arith.constant 0 : i32
    %c0_i32_1 = arith.constant 0 : i32
    return %c0_i32, %c0_i32_0 : i32, i32
  }
  func.func @transform_4(%arg0: i32) -> (i32, i32) {
    %c0_i32 = arith.constant 0 : i32
    %c0_i32_0 = arith.constant 0 : i32
    %c0_i32_1 = arith.constant 0 : i32
    return %c0_i32, %c0_i32_0 : i32, i32
  }
  func.func @transform_5(%arg0: i32) -> (i32, i32) {
    %c0_i32 = arith.constant 0 : i32
    %c0_i32_0 = arith.constant 0 : i32
    %c0_i32_1 = arith.constant 0 : i32
    return %c0_i32, %c0_i32_0 : i32, i32
  }
  func.func @transform_6(%arg0: i32) -> (i32, i32) {
    %c0_i32 = arith.constant 0 : i32
    %c0_i32_0 = arith.constant 0 : i32
    %c0_i32_1 = arith.constant 0 : i32
    return %c0_i32, %c0_i32_0 : i32, i32
  }
  func.func @transform_7(%arg0: i32) -> (i32, i32) {
    %c0_i32 = arith.constant 0 : i32
    %c0_i32_0 = arith.constant 0 : i32
    return %arg0, %c0_i32 : i32, i32
  }
}

</mosaic_0001>

<llo_original>
// kernel: encoder_forward.1
$region0: #{encoder_forward.1}
  #allocation0 [shape = 'u32[]', space=smem, size = 0x4, offset = 0x4, fixed_abs, tag = 'smem constant byte address 0x4 - core index']
  #allocation1 [shape = 'u32[144,128]{1,0:T(1,128)}', space=vmem, size = 0x12000, scoped, tag = 'internal scratch']
  %s0 = inlined_call_operand.hbm [shape: f32[8,32], index: 0, kind: input, shape index: {}]
  %s1 = inlined_call_operand.vmem [shape: f32[32,128], index: 1, kind: input, shape index: {}]
  %s2 = inlined_call_operand.vmem [shape: f32[1,128], index: 2, kind: input, shape index: {}]
  %s3 = inlined_call_operand.vmem [shape: f32[128,128], index: 3, kind: input, shape index: {}]
  %s4 = inlined_call_operand.vmem [shape: f32[1,128], index: 4, kind: input, shape index: {}]
  %s5 = inlined_call_operand.vmem [shape: f32[128,32], index: 5, kind: input, shape index: {}]
  %s6 = inlined_call_operand.vmem [shape: f32[1,32], index: 6, kind: input, shape index: {}]
  %s7 = inlined_call_operand.hbm [shape: f32[8,32], index: 7, kind: output, shape index: {}]
  %s8 = sld [smem:[#allocation0]]
  $region42: #{encoder_forward.1} parent=0
    _
  %s10 = ssub.s32 1, %s8
  %s11 = scalar_select 0, %s10, %s8
  $region1: #{encoder_forward.1} parent=0
    #allocation2 [shape = 'u8[4096]{0}', space=vmem, size = 0x1000, scoped, tag = 'input window, operand 0, single buffered']
    #allocation3 [shape = 's32[1]{0}', space=sflag, size = 0x4, scoped, tag = 'scoped memory for encoder_forward.1']
    #allocation4 [shape = 's32[1]{0}', space=sflag, size = 0x4, scoped, tag = 'scoped memory for encoder_forward.1']
    #allocation5 [shape = 'u8[4096]{0}', space=vmem, size = 0x1000, scoped, tag = 'output window, operand 0, single buffered']
    %12 = vsyncpa [#allocation3], 0
    %13 = vsyncpa [#allocation4], 0
    // Predicated region
    $region2: #{encoder_forward.1} parent=1 // pred_check
      _
    $region3: #{encoder_forward.1} parent=1 // pred_check_branch
      %15 = sbr.rel (0) target = $region5
    $region4: #{encoder_forward.1} parent=1 // pred_region
      %s17 = ssub.s32 128, 128
      %18 = vsyncadd [#allocation3], %s17
      %s20 = sshll.u32 [#allocation2], 4
      %s21 = int_to_ptr.vmem [resolvable:$true] %s20
      %23 = dma.hbm_to_vmem [thread:$0]  %s0, 128, %s21, [#allocation3]
    $region5: #{encoder_forward.1} parent=1 // pred_fallthru
      _
    // Predicated region
    $region6: #{encoder_forward.1} parent=1 // pred_check
      _
    $region7: #{encoder_forward.1} parent=1 // pred_check_branch
      %25 = sbr.rel (0) target = $region9
    $region8: #{encoder_forward.1} parent=1 // pred_region
      _
    $region9: #{encoder_forward.1} parent=1 // pred_fallthru
      _
    // Predicated region
    $region10: #{encoder_forward.1} parent=1 // pred_check
      _
    $region11: #{encoder_forward.1} parent=1 // pred_check_branch
      %27 = sbr.rel (0) target = $region13
    $region12: #{encoder_forward.1} parent=1 // pred_region
      _
    $region13: #{encoder_forward.1} parent=1 // pred_fallthru
      _
    // Predicated region
    $region14: #{encoder_forward.1} parent=1 // pred_check
      _
    $region15: #{encoder_forward.1} parent=1 // pred_check_branch
      %29 = sbr.rel (0) target = $region17
    $region16: #{encoder_forward.1} parent=1 // pred_region
      _
    $region17: #{encoder_forward.1} parent=1 // pred_fallthru
      _
    // Predicated region
    $region18: #{encoder_forward.1} parent=1 // pred_check
      _
    $region19: #{encoder_forward.1} parent=1 // pred_check_branch
      %31 = sbr.rel (0) target = $region21
    $region20: #{encoder_forward.1} parent=1 // pred_region
      _
    $region21: #{encoder_forward.1} parent=1 // pred_fallthru
      _
    // Predicated region
    $region22: #{encoder_forward.1} parent=1 // pred_check
      _
    $region23: #{encoder_forward.1} parent=1 // pred_check_branch
      %33 = sbr.rel (0) target = $region25
    $region24: #{encoder_forward.1} parent=1 // pred_region
      _
    $region25: #{encoder_forward.1} parent=1 // pred_fallthru
      _
    // Predicated region
    $region26: #{encoder_forward.1} parent=1 // pred_check
      _
    $region27: #{encoder_forward.1} parent=1 // pred_check_branch
      %35 = sbr.rel (0) target = $region29
    $region28: #{encoder_forward.1} parent=1 // pred_region
      _
    $region29: #{encoder_forward.1} parent=1 // pred_fallthru
      _
    // Predicated region
    $region30: #{encoder_forward.1} parent=1 // pred_check
      _
    $region31: #{encoder_forward.1} parent=1 // pred_check_branch
      %37 = sbr.rel (0) target = $region33
    $region32: #{encoder_forward.1} parent=1 // pred_region
      %38 = dma.done [#allocation3], 128
    $region33: #{encoder_forward.1} parent=1 // pred_fallthru
      _
    %v39 = vld [vmem:[#allocation2] sm:$0xff]
    %v40 = vld [vmem:[%s1] sm:$0xff]
    %v41 = vld [vmem:[%s1 + $0x8] sm:$0xff]
    %v42 = vld [vmem:[%s1 + $0x10] sm:$0xff]
    %v43 = vld [vmem:[%s1 + $0x18] sm:$0xff]
    %v44 = vld [vmem:[%s2] sm:$0x1]
    %v46 = vlaneseq
    %v47 = vshrl.u32 %v46, 7
    %v48 = vsub.s32 0, %v47
    %v49 = vrot.slane %v44, %v48
    %vm51 = vcmask 261120
    %v53 = vsel %vm51, %v39, 0
    %55 = vmatprep.subr.mxu0 0.0
    %56 = vmatpush1.msra.mxu0 %v40
    %57 = vmatprep.subr.mxu0 0.0
    %58 = vmatpush1.msra.mxu0 %v41
    %59 = vmatprep.subr.mxu0 0.0
    %60 = vmatpush1.msra.mxu0 %v42
    %61 = vmatprep.subr.mxu0 0.0
    %62 = vmatpush1.msra.mxu0 %v43
    %63 = vmatprep.subr.mxu0 0.0
    %64 = vmatpush1.msra.mxu0 0.0
    %65 = vmatprep.subr.mxu0 0.0
    %66 = vmatpush1.msra.mxu0 0.0
    %67 = vmatprep.subr.mxu0 0.0
    %68 = vmatpush1.msra.mxu0 0.0
    %69 = vmatprep.subr.mxu0 0.0
    %70 = vmatpush1.msra.mxu0 0.0
    %71 = vmatprep.subr.mxu0 0.0
    %72 = vmatpush1.msra.mxu0 0.0
    %73 = vmatprep.subr.mxu0 0.0
    %74 = vmatpush1.msra.mxu0 0.0
    %75 = vmatprep.subr.mxu0 0.0
    %76 = vmatpush1.msra.mxu0 0.0
    %77 = vmatprep.subr.mxu0 0.0
    %78 = vmatpush1.msra.mxu0 0.0
    %79 = vmatprep.subr.mxu0 0.0
    %80 = vmatpush1.msra.mxu0 0.0
    %81 = vmatprep.subr.mxu0 0.0
    %82 = vmatpush1.msra.mxu0 0.0
    %83 = vmatprep.subr.mxu0 0.0
    %84 = vmatpush1.msra.mxu0 0.0
    %85 = vmatprep.subr.mxu0 0.0
    %86 = vmatpush1.msra.mxu0 0.0
    %87 = vmatprep.subr.mxu0 0.0
    %88 = vmatpush1.msra.mxu0 0.0
    %89 = vmatprep.subr.mxu0 0.0
    %90 = vmatpush1.msra.mxu0 0.0
    %91 = vmatprep.subr.mxu0 0.0
    %92 = vmatpush1.msra.mxu0 0.0
    %93 = vmatprep.subr.mxu0 0.0
    %94 = vmatpush1.msra.mxu0 0.0
    %95 = vmatprep.subr.mxu0 0.0
    %96 = vmatpush1.msra.mxu0 0.0
    %97 = vmatprep.subr.mxu0 0.0
    %98 = vmatpush1.msra.mxu0 0.0
    %99 = vmatprep.subr.mxu0 0.0
    %100 = vmatpush1.msra.mxu0 0.0
    %101 = vmatprep.subr.mxu0 0.0
    %102 = vmatpush1.msra.mxu0 0.0
    %103 = vmatprep.subr.mxu0 0.0
    %104 = vmatpush1.msra.mxu0 0.0
    %105 = vmatprep.subr.mxu0 0.0
    %106 = vmatpush1.msra.mxu0 0.0
    %107 = vmatprep.subr.mxu0 0.0
    %108 = vmatpush1.msra.mxu0 0.0
    %109 = vmatprep.subr.mxu0 0.0
    %110 = vmatpush1.msra.mxu0 0.0
    %111 = vmatprep.subr.mxu0 0.0
    %112 = vmatpush1.msra.mxu0 0.0
    %113 = vmatprep.subr.mxu0 0.0
    %114 = vmatpush1.msra.mxu0 0.0
    %115 = vmatprep.subr.mxu0 0.0
    %116 = vmatpush1.msra.mxu0 0.0
    %117 = vmatprep.subr.mxu0 0.0
    %118 = vmatpush1.msra.mxu0 0.0
    %119 = vmatprep.mubr.f32.mxu0 0.0
    %120 = vmatmul.mubr.f32.gmra.mrb[0].mxu0 %v53
    %v121 = vpop.f32.mrb[0].mxu0
    %v122 = vadd.f32 %v49, %v121
    %v123 = vpop.f32.mrb[0].mxu0
    %124 = vdwg.mxu0
    %v125 = vmax.f32 %v122, 0.0
    %v126 = vld [vmem:[%s3] sm:$0xff]
    %v127 = vld [vmem:[%s3 + $0x8] sm:$0xff]
    %v128 = vld [vmem:[%s3 + $0x10] sm:$0xff]
    %v129 = vld [vmem:[%s3 + $0x18] sm:$0xff]
    %v130 = vld [vmem:[%s3 + $0x20] sm:$0xff]
    %v131 = vld [vmem:[%s3 + $0x28] sm:$0xff]
    %v132 = vld [vmem:[%s3 + $0x30] sm:$0xff]
    %v133 = vld [vmem:[%s3 + $0x38] sm:$0xff]
    %v134 = vld [vmem:[%s3 + $0x40] sm:$0xff]
    %v135 = vld [vmem:[%s3 + $0x48] sm:$0xff]
    %v136 = vld [vmem:[%s3 + $0x50] sm:$0xff]
    %v137 = vld [vmem:[%s3 + $0x58] sm:$0xff]
    %v138 = vld [vmem:[%s3 + $0x60] sm:$0xff]
    %v139 = vld [vmem:[%s3 + $0x68] sm:$0xff]
    %v140 = vld [vmem:[%s3 + $0x70] sm:$0xff]
    %v141 = vld [vmem:[%s3 + $0x78] sm:$0xff]
    %v142 = vld [vmem:[%s4] sm:$0x1]
    %v144 = vlaneseq
    %v145 = vshrl.u32 %v144, 7
    %v146 = vsub.s32 0, %v145
    %v147 = vrot.slane %v142, %v146
    %149 = vmatprep.subr.mxu0 0.0
    %150 = vmatpush1.msra.mxu0 %v126
    %151 = vmatprep.subr.mxu0 0.0
    %152 = vmatpush1.msra.mxu0 %v127
    %153 = vmatprep.subr.mxu0 0.0
    %154 = vmatpush1.msra.mxu0 %v128
    %155 = vmatprep.subr.mxu0 0.0
    %156 = vmatpush1.msra.mxu0 %v129
    %157 = vmatprep.subr.mxu0 0.0
    %158 = vmatpush1.msra.mxu0 %v130
    %159 = vmatprep.subr.mxu0 0.0
    %160 = vmatpush1.msra.mxu0 %v131
    %161 = vmatprep.subr.mxu0 0.0
    %162 = vmatpush1.msra.mxu0 %v132
    %163 = vmatprep.subr.mxu0 0.0
    %164 = vmatpush1.msra.mxu0 %v133
    %165 = vmatprep.subr.mxu0 0.0
    %166 = vmatpush1.msra.mxu0 %v134
    %167 = vmatprep.subr.mxu0 0.0
    %168 = vmatpush1.msra.mxu0 %v135
    %169 = vmatprep.subr.mxu0 0.0
    %170 = vmatpush1.msra.mxu0 %v136
    %171 = vmatprep.subr.mxu0 0.0
    %172 = vmatpush1.msra.mxu0 %v137
    %173 = vmatprep.subr.mxu0 0.0
    %174 = vmatpush1.msra.mxu0 %v138
    %175 = vmatprep.subr.mxu0 0.0
    %176 = vmatpush1.msra.mxu0 %v139
    %177 = vmatprep.subr.mxu0 0.0
    %178 = vmatpush1.msra.mxu0 %v140
    %179 = vmatprep.subr.mxu0 0.0
    %180 = vmatpush1.msra.mxu0 %v141
    %181 = vmatprep.subr.mxu0 0.0
    %182 = vmatpush1.msra.mxu0 0.0
    %183 = vmatprep.subr.mxu0 0.0
    %184 = vmatpush1.msra.mxu0 0.0
    %185 = vmatprep.subr.mxu0 0.0
    %186 = vmatpush1.msra.mxu0 0.0
    %187 = vmatprep.subr.mxu0 0.0
    %188 = vmatpush1.msra.mxu0 0.0
    %189 = vmatprep.subr.mxu0 0.0
    %190 = vmatpush1.msra.mxu0 0.0
    %191 = vmatprep.subr.mxu0 0.0
    %192 = vmatpush1.msra.mxu0 0.0
    %193 = vmatprep.subr.mxu0 0.0
    %194 = vmatpush1.msra.mxu0 0.0
    %195 = vmatprep.subr.mxu0 0.0
    %196 = vmatpush1.msra.mxu0 0.0
    %197 = vmatprep.subr.mxu0 0.0
    %198 = vmatpush1.msra.mxu0 0.0
    %199 = vmatprep.subr.mxu0 0.0
    %200 = vmatpush1.msra.mxu0 0.0
    %201 = vmatprep.subr.mxu0 0.0
    %202 = vmatpush1.msra.mxu0 0.0
    %203 = vmatprep.subr.mxu0 0.0
    %204 = vmatpush1.msra.mxu0 0.0
    %205 = vmatprep.subr.mxu0 0.0
    %206 = vmatpush1.msra.mxu0 0.0
    %207 = vmatprep.subr.mxu0 0.0
    %208 = vmatpush1.msra.mxu0 0.0
    %209 = vmatprep.subr.mxu0 0.0
    %210 = vmatpush1.msra.mxu0 0.0
    %211 = vmatprep.subr.mxu0 0.0
    %212 = vmatpush1.msra.mxu0 0.0
    %213 = vmatprep.mubr.f32.mxu0 0.0
    %214 = vmatmul.mubr.f32.gmra.mrb[0].mxu0 %v125
    %v215 = vpop.f32.mrb[0].mxu0
    %v216 = vadd.f32 %v147, %v215
    %v217 = vpop.f32.mrb[0].mxu0
    %218 = vdwg.mxu0
    %v219 = vmax.f32 %v216, 0.0
    %v220 = vld [vmem:[%s5] sm:$0xff]
    %v221 = vld [vmem:[%s5 + $0x8] sm:$0xff]
    %v222 = vld [vmem:[%s5 + $0x10] sm:$0xff]
    %v223 = vld [vmem:[%s5 + $0x18] sm:$0xff]
    %v224 = vld [vmem:[%s5 + $0x20] sm:$0xff]
    %v225 = vld [vmem:[%s5 + $0x28] sm:$0xff]
    %v226 = vld [vmem:[%s5 + $0x30] sm:$0xff]
    %v227 = vld [vmem:[%s5 + $0x38] sm:$0xff]
    %v228 = vld [vmem:[%s5 + $0x40] sm:$0xff]
    %v229 = vld [vmem:[%s5 + $0x48] sm:$0xff]
    %v230 = vld [vmem:[%s5 + $0x50] sm:$0xff]
    %v231 = vld [vmem:[%s5 + $0x58] sm:$0xff]
    %v232 = vld [vmem:[%s5 + $0x60] sm:$0xff]
    %v233 = vld [vmem:[%s5 + $0x68] sm:$0xff]
    %v234 = vld [vmem:[%s5 + $0x70] sm:$0xff]
    %v235 = vld [vmem:[%s5 + $0x78] sm:$0xff]
    %v236 = vld [vmem:[%s6] sm:$0x1]
    %v238 = vlaneseq
    %v239 = vshrl.u32 %v238, 7
    %v240 = vsub.s32 0, %v239
    %v241 = vrot.slane %v236, %v240
    %243 = vmatprep.subr.mxu0 0.0
    %244 = vmatpush1.msra.mxu0 %v220
    %245 = vmatprep.subr.mxu0 0.0
    %246 = vmatpush1.msra.mxu0 %v221
    %247 = vmatprep.subr.mxu0 0.0
    %248 = vmatpush1.msra.mxu0 %v222
    %249 = vmatprep.subr.mxu0 0.0
    %250 = vmatpush1.msra.mxu0 %v223
    %251 = vmatprep.subr.mxu0 0.0
    %252 = vmatpush1.msra.mxu0 %v224
    %253 = vmatprep.subr.mxu0 0.0
    %254 = vmatpush1.msra.mxu0 %v225
    %255 = vmatprep.subr.mxu0 0.0
    %256 = vmatpush1.msra.mxu0 %v226
    %257 = vmatprep.subr.mxu0 0.0
    %258 = vmatpush1.msra.mxu0 %v227
    %259 = vmatprep.subr.mxu0 0.0
    %260 = vmatpush1.msra.mxu0 %v228
    %261 = vmatprep.subr.mxu0 0.0
    %262 = vmatpush1.msra.mxu0 %v229
    %263 = vmatprep.subr.mxu0 0.0
    %264 = vmatpush1.msra.mxu0 %v230
    %265 = vmatprep.subr.mxu0 0.0
    %266 = vmatpush1.msra.mxu0 %v231
    %267 = vmatprep.subr.mxu0 0.0
    %268 = vmatpush1.msra.mxu0 %v232
    %269 = vmatprep.subr.mxu0 0.0
    %270 = vmatpush1.msra.mxu0 %v233
    %271 = vmatprep.subr.mxu0 0.0
    %272 = vmatpush1.msra.mxu0 %v234
    %273 = vmatprep.subr.mxu0 0.0
    %274 = vmatpush1.msra.mxu0 %v235
    %275 = vmatprep.subr.mxu0 0.0
    %276 = vmatpush1.msra.mxu0 0.0
    %277 = vmatprep.subr.mxu0 0.0
    %278 = vmatpush1.msra.mxu0 0.0
    %279 = vmatprep.subr.mxu0 0.0
    %280 = vmatpush1.msra.mxu0 0.0
    %281 = vmatprep.subr.mxu0 0.0
    %282 = vmatpush1.msra.mxu0 0.0
    %283 = vmatprep.subr.mxu0 0.0
    %284 = vmatpush1.msra.mxu0 0.0
    %285 = vmatprep.subr.mxu0 0.0
    %286 = vmatpush1.msra.mxu0 0.0
    %287 = vmatprep.subr.mxu0 0.0
    %288 = vmatpush1.msra.mxu0 0.0
    %289 = vmatprep.subr.mxu0 0.0
    %290 = vmatpush1.msra.mxu0 0.0
    %291 = vmatprep.subr.mxu0 0.0
    %292 = vmatpush1.msra.mxu0 0.0
    %293 = vmatprep.subr.mxu0 0.0
    %294 = vmatpush1.msra.mxu0 0.0
    %295 = vmatprep.subr.mxu0 0.0
    %296 = vmatpush1.msra.mxu0 0.0
    %297 = vmatprep.subr.mxu0 0.0
    %298 = vmatpush1.msra.mxu0 0.0
    %299 = vmatprep.subr.mxu0 0.0
    %300 = vmatpush1.msra.mxu0 0.0
    %301 = vmatprep.subr.mxu0 0.0
    %302 = vmatpush1.msra.mxu0 0.0
    %303 = vmatprep.subr.mxu0 0.0
    %304 = vmatpush1.msra.mxu0 0.0
    %305 = vmatprep.subr.mxu0 0.0
    %306 = vmatpush1.msra.mxu0 0.0
    %307 = vmatprep.mubr.f32.mxu0 0.0
    %308 = vmatmul.mubr.f32.gmra.mrb[0].mxu0 %v219
    %v309 = vpop.f32.mrb[0].mxu0
    %v310 = vadd.f32 %v241, %v309
    %v311 = vpop.f32.mrb[0].mxu0
    %312 = vdwg.mxu0
    %v313 = vmax.f32 %v310, 0.0
    %314 = vst.msk [vmem:[#allocation5] sm:$0xff] %vm51, %v313
    // Predicated region
    $region34: #{encoder_forward.1} parent=1 // pred_check
      _
    $region35: #{encoder_forward.1} parent=1 // pred_check_branch
      %316 = sbr.rel (0) target = $region37
    $region36: #{encoder_forward.1} parent=1 // pred_region
      %s318 = ssub.s32 128, 128
      %319 = vsyncadd [#allocation4], %s318
      %s321 = sshll.u32 [#allocation5], 4
      %s322 = int_to_ptr.vmem [resolvable:$true] %s321
      %324 = dma.vmem_to_hbm [thread:$0]  %s322, 128, %s7, [#allocation4]
    $region37: #{encoder_forward.1} parent=1 // pred_fallthru
      _
    // Predicated region
    $region38: #{encoder_forward.1} parent=1 // pred_check
      _
    $region39: #{encoder_forward.1} parent=1 // pred_check_branch
      %326 = sbr.rel (0) target = $region41
    $region40: #{encoder_forward.1} parent=1 // pred_region
      %327 = dma.done [#allocation4], 128
    $region41: #{encoder_forward.1} parent=1 // pred_fallthru
      _
    %328 = vsyncpa [#allocation3], 1
    %329 = vsyncpa [#allocation4], 1

// kernel: encoder_forward.1
$region0: #{encoder_forward.1}
  #allocation0 [shape = 'u32[]', space=smem, size = 0x4, offset = 0x4, fixed_abs, tag = 'smem constant byte address 0x4 - core index']
  #allocation1 [shape = 'u32[144,128]{1,0:T(1,128)}', space=vmem, size = 0x12000, scoped, tag = 'internal scratch']
  %s0 = inlined_call_operand.hbm [shape: f32[8,32], index: 0, kind: input, shape index: {}]
  %s1 = inlined_call_operand.vmem [shape: f32[32,128], index: 1, kind: input, shape index: {}]
  %s2 = inlined_call_operand.vmem [shape: f32[1,128], index: 2, kind: input, shape index: {}]
  %s3 = inlined_call_operand.vmem [shape: f32[128,128], index: 3, kind: input, shape index: {}]
  %s4 = inlined_call_operand.vmem [shape: f32[1,128], index: 4, kind: input, shape index: {}]
  %s5 = inlined_call_operand.vmem [shape: f32[128,32], index: 5, kind: input, shape index: {}]
  %s6 = inlined_call_operand.vmem [shape: f32[1,32], index: 6, kind: input, shape index: {}]
  %s7 = inlined_call_operand.hbm [shape: f32[8,32], index: 7, kind: output, shape index: {}]
  %s8 = sld [smem:[#allocation0]]
  $region42: #{encoder_forward.1} parent=0
    _
  %s10 = ssub.s32 1, %s8
  %s11 = scalar_select 0, %s10, %s8
  $region1: #{encoder_forward.1} parent=0
    #allocation2 [shape = 'u8[4096]{0}', space=vmem, size = 0x1000, scoped, tag = 'input window, operand 0, single buffered']
    #allocation3 [shape = 's32[1]{0}', space=sflag, size = 0x4, scoped, tag = 'scoped memory for encoder_forward.1']
    #allocation4 [shape = 's32[1]{0}', space=sflag, size = 0x4, scoped, tag = 'scoped memory for encoder_forward.1']
    #allocation5 [shape = 'u8[4096]{0}', space=vmem, size = 0x1000, scoped, tag = 'output window, operand 0, single buffered']
    %12 = vsyncpa [#allocation3], 0
    %13 = vsyncpa [#allocation4], 0
    // Predicated region
    $region2: #{encoder_forward.1} parent=1 // pred_check
      _
    $region3: #{encoder_forward.1} parent=1 // pred_check_branch
      %15 = sbr.rel (0) target = $region5
    $region4: #{encoder_forward.1} parent=1 // pred_region
      %s17 = ssub.s32 128, 128
      %18 = vsyncadd [#allocation3], %s17
      %s20 = sshll.u32 [#allocation2], 4
      %s21 = int_to_ptr.vmem [resolvable:$true] %s20
      %23 = dma.hbm_to_vmem [thread:$0]  %s0, 128, %s21, [#allocation3]
    $region5: #{encoder_forward.1} parent=1 // pred_fallthru
      _
    // Predicated region
    $region6: #{encoder_forward.1} parent=1 // pred_check
      _
    $region7: #{encoder_forward.1} parent=1 // pred_check_branch
      %25 = sbr.rel (0) target = $region9
    $region8: #{encoder_forward.1} parent=1 // pred_region
      _
    $region9: #{encoder_forward.1} parent=1 // pred_fallthru
      _
    // Predicated region
    $region10: #{encoder_forward.1} parent=1 // pred_check
      _
    $region11: #{encoder_forward.1} parent=1 // pred_check_branch
      %27 = sbr.rel (0) target = $region13
    $region12: #{encoder_forward.1} parent=1 // pred_region
      _
    $region13: #{encoder_forward.1} parent=1 // pred_fallthru
      _
    // Predicated region
    $region14: #{encoder_forward.1} parent=1 // pred_check
      _
    $region15: #{encoder_forward.1} parent=1 // pred_check_branch
      %29 = sbr.rel (0) target = $region17
    $region16: #{encoder_forward.1} parent=1 // pred_region
      _
    $region17: #{encoder_forward.1} parent=1 // pred_fallthru
      _
    // Predicated region
    $region18: #{encoder_forward.1} parent=1 // pred_check
      _
    $region19: #{encoder_forward.1} parent=1 // pred_check_branch
      %31 = sbr.rel (0) target = $region21
    $region20: #{encoder_forward.1} parent=1 // pred_region
      _
    $region21: #{encoder_forward.1} parent=1 // pred_fallthru
      _
    // Predicated region
    $region22: #{encoder_forward.1} parent=1 // pred_check
      _
    $region23: #{encoder_forward.1} parent=1 // pred_check_branch
      %33 = sbr.rel (0) target = $region25
    $region24: #{encoder_forward.1} parent=1 // pred_region
      _
    $region25: #{encoder_forward.1} parent=1 // pred_fallthru
      _
    // Predicated region
    $region26: #{encoder_forward.1} parent=1 // pred_check
      _
    $region27: #{encoder_forward.1} parent=1 // pred_check_branch
      %35 = sbr.rel (0) target = $region29
    $region28: #{encoder_forward.1} parent=1 // pred_region
      _
    $region29: #{encoder_forward.1} parent=1 // pred_fallthru
      _
    // Predicated region
    $region30: #{encoder_forward.1} parent=1 // pred_check
      _
    $region31: #{encoder_forward.1} parent=1 // pred_check_branch
      %37 = sbr.rel (0) target = $region33
    $region32: #{encoder_forward.1} parent=1 // pred_region
      %38 = dma.done [#allocation3], 128
    $region33: #{encoder_forward.1} parent=1 // pred_fallthru
      _
    %v39 = vld [vmem:[#allocation2] sm:$0xff]
    %v40 = vld [vmem:[%s1] sm:$0xff]
    %v41 = vld [vmem:[%s1 + $0x8] sm:$0xff]
    %v42 = vld [vmem:[%s1 + $0x10] sm:$0xff]
    %v43 = vld [vmem:[%s1 + $0x18] sm:$0xff]
    %v44 = vld [vmem:[%s2] sm:$0x1]
    %v46 = vlaneseq
    %v47 = vshrl.u32 %v46, 7
    %v48 = vsub.s32 0, %v47
    %v49 = vrot.slane %v44, %v48
    %vm51 = vcmask 261120
    %v53 = vsel %vm51, %v39, 0
    %55 = vmatprep.subr.mxu0 0.0
    %56 = vmatpush1.msra.mxu0 %v40
    %57 = vmatprep.subr.mxu0 0.0
    %58 = vmatpush1.msra.mxu0 %v41
    %59 = vmatprep.subr.mxu0 0.0
    %60 = vmatpush1.msra.mxu0 %v42
    %61 = vmatprep.subr.mxu0 0.0
    %62 = vmatpush1.msra.mxu0 %v43
    %63 = vmatprep.subr.mxu0 0.0
    %64 = vmatpush1.msra.mxu0 0.0
    %65 = vmatprep.subr.mxu0 0.0
    %66 = vmatpush1.msra.mxu0 0.0
    %67 = vmatprep.subr.mxu0 0.0
    %68 = vmatpush1.msra.mxu0 0.0
    %69 = vmatprep.subr.mxu0 0.0
    %70 = vmatpush1.msra.mxu0 0.0
    %71 = vmatprep.subr.mxu0 0.0
    %72 = vmatpush1.msra.mxu0 0.0
    %73 = vmatprep.subr.mxu0 0.0
    %74 = vmatpush1.msra.mxu0 0.0
    %75 = vmatprep.subr.mxu0 0.0
    %76 = vmatpush1.msra.mxu0 0.0
    %77 = vmatprep.subr.mxu0 0.0
    %78 = vmatpush1.msra.mxu0 0.0
    %79 = vmatprep.subr.mxu0 0.0
    %80 = vmatpush1.msra.mxu0 0.0
    %81 = vmatprep.subr.mxu0 0.0
    %82 = vmatpush1.msra.mxu0 0.0
    %83 = vmatprep.subr.mxu0 0.0
    %84 = vmatpush1.msra.mxu0 0.0
    %85 = vmatprep.subr.mxu0 0.0
    %86 = vmatpush1.msra.mxu0 0.0
    %87 = vmatprep.subr.mxu0 0.0
    %88 = vmatpush1.msra.mxu0 0.0
    %89 = vmatprep.subr.mxu0 0.0
    %90 = vmatpush1.msra.mxu0 0.0
    %91 = vmatprep.subr.mxu0 0.0
    %92 = vmatpush1.msra.mxu0 0.0
    %93 = vmatprep.subr.mxu0 0.0
    %94 = vmatpush1.msra.mxu0 0.0
    %95 = vmatprep.subr.mxu0 0.0
    %96 = vmatpush1.msra.mxu0 0.0
    %97 = vmatprep.subr.mxu0 0.0
    %98 = vmatpush1.msra.mxu0 0.0
    %99 = vmatprep.subr.mxu0 0.0
    %100 = vmatpush1.msra.mxu0 0.0
    %101 = vmatprep.subr.mxu0 0.0
    %102 = vmatpush1.msra.mxu0 0.0
    %103 = vmatprep.subr.mxu0 0.0
    %104 = vmatpush1.msra.mxu0 0.0
    %105 = vmatprep.subr.mxu0 0.0
    %106 = vmatpush1.msra.mxu0 0.0
    %107 = vmatprep.subr.mxu0 0.0
    %108 = vmatpush1.msra.mxu0 0.0
    %109 = vmatprep.subr.mxu0 0.0
    %110 = vmatpush1.msra.mxu0 0.0
    %111 = vmatprep.subr.mxu0 0.0
    %112 = vmatpush1.msra.mxu0 0.0
    %113 = vmatprep.subr.mxu0 0.0
    %114 = vmatpush1.msra.mxu0 0.0
    %115 = vmatprep.subr.mxu0 0.0
    %116 = vmatpush1.msra.mxu0 0.0
    %117 = vmatprep.subr.mxu0 0.0
    %118 = vmatpush1.msra.mxu0 0.0
    %119 = vmatprep.mubr.f32.mxu0 0.0
    %120 = vmatmul.mubr.f32.gmra.mrb[0].mxu0 %v53
    %v121 = vpop.f32.mrb[0].mxu0
    %v122 = vadd.f32 %v49, %v121
    %v123 = vpop.f32.mrb[0].mxu0
    %124 = vdwg.mxu0
    %v125 = vmax.f32 %v122, 0.0
    %v126 = vld [vmem:[%s3] sm:$0xff]
    %v127 = vld [vmem:[%s3 + $0x8] sm:$0xff]
    %v128 = vld [vmem:[%s3 + $0x10] sm:$0xff]
    %v129 = vld [vmem:[%s3 + $0x18] sm:$0xff]
    %v130 = vld [vmem:[%s3 + $0x20] sm:$0xff]
    %v131 = vld [vmem:[%s3 + $0x28] sm:$0xff]
    %v132 = vld [vmem:[%s3 + $0x30] sm:$0xff]
    %v133 = vld [vmem:[%s3 + $0x38] sm:$0xff]
    %v134 = vld [vmem:[%s3 + $0x40] sm:$0xff]
    %v135 = vld [vmem:[%s3 + $0x48] sm:$0xff]
    %v136 = vld [vmem:[%s3 + $0x50] sm:$0xff]
    %v137 = vld [vmem:[%s3 + $0x58] sm:$0xff]
    %v138 = vld [vmem:[%s3 + $0x60] sm:$0xff]
    %v139 = vld [vmem:[%s3 + $0x68] sm:$0xff]
    %v140 = vld [vmem:[%s3 + $0x70] sm:$0xff]
    %v141 = vld [vmem:[%s3 + $0x78] sm:$0xff]
    %v142 = vld [vmem:[%s4] sm:$0x1]
    %v144 = vlaneseq
    %v145 = vshrl.u32 %v144, 7
    %v146 = vsub.s32 0, %v145
    %v147 = vrot.slane %v142, %v146
    %149 = vmatprep.subr.mxu0 0.0
    %150 = vmatpush1.msra.mxu0 %v126
    %151 = vmatprep.subr.mxu0 0.0
    %152 = vmatpush1.msra.mxu0 %v127
    %153 = vmatprep.subr.mxu0 0.0
    %154 = vmatpush1.msra.mxu0 %v128
    %155 = vmatprep.subr.mxu0 0.0
    %156 = vmatpush1.msra.mxu0 %v129
    %157 = vmatprep.subr.mxu0 0.0
    %158 = vmatpush1.msra.mxu0 %v130
    %159 = vmatprep.subr.mxu0 0.0
    %160 = vmatpush1.msra.mxu0 %v131
    %161 = vmatprep.subr.mxu0 0.0
    %162 = vmatpush1.msra.mxu0 %v132
    %163 = vmatprep.subr.mxu0 0.0
    %164 = vmatpush1.msra.mxu0 %v133
    %165 = vmatprep.subr.mxu0 0.0
    %166 = vmatpush1.msra.mxu0 %v134
    %167 = vmatprep.subr.mxu0 0.0
    %168 = vmatpush1.msra.mxu0 %v135
    %169 = vmatprep.subr.mxu0 0.0
    %170 = vmatpush1.msra.mxu0 %v136
    %171 = vmatprep.subr.mxu0 0.0
    %172 = vmatpush1.msra.mxu0 %v137
    %173 = vmatprep.subr.mxu0 0.0
    %174 = vmatpush1.msra.mxu0 %v138
    %175 = vmatprep.subr.mxu0 0.0
    %176 = vmatpush1.msra.mxu0 %v139
    %177 = vmatprep.subr.mxu0 0.0
    %178 = vmatpush1.msra.mxu0 %v140
    %179 = vmatprep.subr.mxu0 0.0
    %180 = vmatpush1.msra.mxu0 %v141
    %181 = vmatprep.subr.mxu0 0.0
    %182 = vmatpush1.msra.mxu0 0.0
    %183 = vmatprep.subr.mxu0 0.0
    %184 = vmatpush1.msra.mxu0 0.0
    %185 = vmatprep.subr.mxu0 0.0
    %186 = vmatpush1.msra.mxu0 0.0
    %187 = vmatprep.subr.mxu0 0.0
    %188 = vmatpush1.msra.mxu0 0.0
    %189 = vmatprep.subr.mxu0 0.0
    %190 = vmatpush1.msra.mxu0 0.0
    %191 = vmatprep.subr.mxu0 0.0
    %192 = vmatpush1.msra.mxu0 0.0
    %193 = vmatprep.subr.mxu0 0.0
    %194 = vmatpush1.msra.mxu0 0.0
    %195 = vmatprep.subr.mxu0 0.0
    %196 = vmatpush1.msra.mxu0 0.0
    %197 = vmatprep.subr.mxu0 0.0
    %198 = vmatpush1.msra.mxu0 0.0
    %199 = vmatprep.subr.mxu0 0.0
    %200 = vmatpush1.msra.mxu0 0.0
    %201 = vmatprep.subr.mxu0 0.0
    %202 = vmatpush1.msra.mxu0 0.0
    %203 = vmatprep.subr.mxu0 0.0
    %204 = vmatpush1.msra.mxu0 0.0
    %205 = vmatprep.subr.mxu0 0.0
    %206 = vmatpush1.msra.mxu0 0.0
    %207 = vmatprep.subr.mxu0 0.0
    %208 = vmatpush1.msra.mxu0 0.0
    %209 = vmatprep.subr.mxu0 0.0
    %210 = vmatpush1.msra.mxu0 0.0
    %211 = vmatprep.subr.mxu0 0.0
    %212 = vmatpush1.msra.mxu0 0.0
    %213 = vmatprep.mubr.f32.mxu0 0.0
    %214 = vmatmul.mubr.f32.gmra.mrb[0].mxu0 %v125
    %v215 = vpop.f32.mrb[0].mxu0
    %v216 = vadd.f32 %v147, %v215
    %v217 = vpop.f32.mrb[0].mxu0
    %218 = vdwg.mxu0
    %v219 = vmax.f32 %v216, 0.0
    %v220 = vld [vmem:[%s5] sm:$0xff]
    %v221 = vld [vmem:[%s5 + $0x8] sm:$0xff]
    %v222 = vld [vmem:[%s5 + $0x10] sm:$0xff]
    %v223 = vld [vmem:[%s5 + $0x18] sm:$0xff]
    %v224 = vld [vmem:[%s5 + $0x20] sm:$0xff]
    %v225 = vld [vmem:[%s5 + $0x28] sm:$0xff]
    %v226 = vld [vmem:[%s5 + $0x30] sm:$0xff]
    %v227 = vld [vmem:[%s5 + $0x38] sm:$0xff]
    %v228 = vld [vmem:[%s5 + $0x40] sm:$0xff]
    %v229 = vld [vmem:[%s5 + $0x48] sm:$0xff]
    %v230 = vld [vmem:[%s5 + $0x50] sm:$0xff]
    %v231 = vld [vmem:[%s5 + $0x58] sm:$0xff]
    %v232 = vld [vmem:[%s5 + $0x60] sm:$0xff]
    %v233 = vld [vmem:[%s5 + $0x68] sm:$0xff]
    %v234 = vld [vmem:[%s5 + $0x70] sm:$0xff]
    %v235 = vld [vmem:[%s5 + $0x78] sm:$0xff]
    %v236 = vld [vmem:[%s6] sm:$0x1]
    %v238 = vlaneseq
    %v239 = vshrl.u32 %v238, 7
    %v240 = vsub.s32 0, %v239
    %v241 = vrot.slane %v236, %v240
    %243 = vmatprep.subr.mxu0 0.0
    %244 = vmatpush1.msra.mxu0 %v220
    %245 = vmatprep.subr.mxu0 0.0
    %246 = vmatpush1.msra.mxu0 %v221
    %247 = vmatprep.subr.mxu0 0.0
    %248 = vmatpush1.msra.mxu0 %v222
    %249 = vmatprep.subr.mxu0 0.0
    %250 = vmatpush1.msra.mxu0 %v223
    %251 = vmatprep.subr.mxu0 0.0
    %252 = vmatpush1.msra.mxu0 %v224
    %253 = vmatprep.subr.mxu0 0.0
    %254 = vmatpush1.msra.mxu0 %v225
    %255 = vmatprep.subr.mxu0 0.0
    %256 = vmatpush1.msra.mxu0 %v226
    %257 = vmatprep.subr.mxu0 0.0
    %258 = vmatpush1.msra.mxu0 %v227
    %259 = vmatprep.subr.mxu0 0.0
    %260 = vmatpush1.msra.mxu0 %v228
    %261 = vmatprep.subr.mxu0 0.0
    %262 = vmatpush1.msra.mxu0 %v229
    %263 = vmatprep.subr.mxu0 0.0
    %264 = vmatpush1.msra.mxu0 %v230
    %265 = vmatprep.subr.mxu0 0.0
    %266 = vmatpush1.msra.mxu0 %v231
    %267 = vmatprep.subr.mxu0 0.0
    %268 = vmatpush1.msra.mxu0 %v232
    %269 = vmatprep.subr.mxu0 0.0
    %270 = vmatpush1.msra.mxu0 %v233
    %271 = vmatprep.subr.mxu0 0.0
    %272 = vmatpush1.msra.mxu0 %v234
    %273 = vmatprep.subr.mxu0 0.0
    %274 = vmatpush1.msra.mxu0 %v235
    %275 = vmatprep.subr.mxu0 0.0
    %276 = vmatpush1.msra.mxu0 0.0
    %277 = vmatprep.subr.mxu0 0.0
    %278 = vmatpush1.msra.mxu0 0.0
    %279 = vmatprep.subr.mxu0 0.0
    %280 = vmatpush1.msra.mxu0 0.0
    %281 = vmatprep.subr.mxu0 0.0
    %282 = vmatpush1.msra.mxu0 0.0
    %283 = vmatprep.subr.mxu0 0.0
    %284 = vmatpush1.msra.mxu0 0.0
    %285 = vmatprep.subr.mxu0 0.0
    %286 = vmatpush1.msra.mxu0 0.0
    %287 = vmatprep.subr.mxu0 0.0
    %288 = vmatpush1.msra.mxu0 0.0
    %289 = vmatprep.subr.mxu0 0.0
    %290 = vmatpush1.msra.mxu0 0.0
    %291 = vmatprep.subr.mxu0 0.0
    %292 = vmatpush1.msra.mxu0 0.0
    %293 = vmatprep.subr.mxu0 0.0
    %294 = vmatpush1.msra.mxu0 0.0
    %295 = vmatprep.subr.mxu0 0.0
    %296 = vmatpush1.msra.mxu0 0.0
    %297 = vmatprep.subr.mxu0 0.0
    %298 = vmatpush1.msra.mxu0 0.0
    %299 = vmatprep.subr.mxu0 0.0
    %300 = vmatpush1.msra.mxu0 0.0
    %301 = vmatprep.subr.mxu0 0.0
    %302 = vmatpush1.msra.mxu0 0.0
    %303 = vmatprep.subr.mxu0 0.0
    %304 = vmatpush1.msra.mxu0 0.0
    %305 = vmatprep.subr.mxu0 0.0
    %306 = vmatpush1.msra.mxu0 0.0
    %307 = vmatprep.mubr.f32.mxu0 0.0
    %308 = vmatmul.mubr.f32.gmra.mrb[0].mxu0 %v219
    %v309 = vpop.f32.mrb[0].mxu0
    %v310 = vadd.f32 %v241, %v309
    %v311 = vpop.f32.mrb[0].mxu0
    %312 = vdwg.mxu0
    %v313 = vmax.f32 %v310, 0.0
    %314 = vst.msk [vmem:[#allocation5] sm:$0xff] %vm51, %v313
    // Predicated region
    $region34: #{encoder_forward.1} parent=1 // pred_check
      _
    $region35: #{encoder_forward.1} parent=1 // pred_check_branch
      %316 = sbr.rel (0) target = $region37
    $region36: #{encoder_forward.1} parent=1 // pred_region
      %s318 = ssub.s32 128, 128
      %319 = vsyncadd [#allocation4], %s318
      %s321 = sshll.u32 [#allocation5], 4
      %s322 = int_to_ptr.vmem [resolvable:$true] %s321
      %324 = dma.vmem_to_hbm [thread:$0]  %s322, 128, %s7, [#allocation4]
    $region37: #{encoder_forward.1} parent=1 // pred_fallthru
      _
    // Predicated region
    $region38: #{encoder_forward.1} parent=1 // pred_check
      _
    $region39: #{encoder_forward.1} parent=1 // pred_check_branch
      %326 = sbr.rel (0) target = $region41
    $region40: #{encoder_forward.1} parent=1 // pred_region
      %327 = dma.done [#allocation4], 128
    $region41: #{encoder_forward.1} parent=1 // pred_fallthru
      _
    %328 = vsyncpa [#allocation3], 1
    %329 = vsyncpa [#allocation4], 1

</llo_original>
